<compile_context>
chip_gen: v7x
topology: tpu7x:2x2x1
jax: 0.10.0
libtpu: 0.0.40
codegen_flags: <defaults>
</compile_context>

<pallas_src>
import jax
import jax.numpy as jnp
from jax.experimental import pallas as pl
from jax.experimental.pallas import tpu as pltpu

IN_DIM = 28 * 28   # 784
H1 = 128
H2 = 64
OUT = 10

H2_PAD = 128       # pad 64 -> 128 (lane width)
OUT_PAD = 128      # pad 10 -> 128 (lane width)


def _round_up(x, m):
    return (x + m - 1) // m * m


def mlp_kernel(x_ref, w1_ref, b1_ref, w2_ref, b2_ref, w3_ref, b3_ref, o_ref):
    # Cast x to bf16 inside the kernel (f32 read from HBM, VPU cast hidden under DMA).
    x = x_ref[...].astype(jnp.bfloat16)
    # fc1 + ReLU  (bf16 operands, f32 accumulate, f32 bias add)
    h1 = jnp.dot(x, w1_ref[...], preferred_element_type=jnp.float32)
    h1 = jnp.maximum(h1 + b1_ref[...], 0.0).astype(jnp.bfloat16)
    # fc2 + ReLU (H2 padded to 128; padded lanes stay exactly 0 after ReLU)
    h2 = jnp.dot(h1, w2_ref[...], preferred_element_type=jnp.float32)
    h2 = jnp.maximum(h2 + b2_ref[...], 0.0).astype(jnp.bfloat16)
    # fc3 (logits, OUT padded to 128; padded lanes are exactly 0). Store as bf16.
    o = jnp.dot(h2, w3_ref[...], preferred_element_type=jnp.float32)
    o_ref[...] = (o + b3_ref[...]).astype(o_ref.dtype)


def mlp_forward(x_nchw, w1, b1, w2, b2, w3, b3, tile_b=2048):
    """x_nchw: (B, 1, 28, 28) float; weights stored as (in, out) like W.T in torch."""
    B = x_nchw.shape[0]

    # Flatten (PyTorch nn.Flatten on NCHW == row-major reshape); keep f32 — the bf16
    # cast happens inside the kernel so x crosses HBM exactly once.
    x = x_nchw.reshape(B, -1).astype(jnp.float32)
    assert x.shape[1] == IN_DIM

    # --- Batch tiling -------------------------------------------------------------
    # TILE_B is a multiple of 128 (MXU/sublane alignment on all gens). Default 2048
    # amortizes the ~0.35us/step grid overhead while fitting scoped VMEM everywhere.
    padded128 = _round_up(B, 128)
    tile = min(tile_b, padded128)
    tile = _round_up(tile, 128)
    # v7x megacore: prefer >= 2 batch tiles (both TensorCores busy) whenever the batch
    # is big enough to split into two 128-row tiles.
    if padded128 >= 2 * 128 and tile >= padded128:
        tile = _round_up(padded128 // 2, 128)
    padded_b = _round_up(B, tile)
    if padded_b != B:
        x = jnp.pad(x, ((0, padded_b - B), (0, 0)))
    n_tiles = padded_b // tile

    # --- Pad weights/biases to lane width; cast weights to bf16, biases stay f32. ---
    w1p = w1.astype(jnp.bfloat16)                                   # (784, 128)
    b1p = b1.reshape(1, H1).astype(jnp.float32)                     # (1, 128)

    w2p = jnp.zeros((H1, H2_PAD), jnp.bfloat16).at[:, :H2].set(w2.astype(jnp.bfloat16))
    b2p = jnp.zeros((1, H2_PAD), jnp.float32).at[0, :H2].set(b2.astype(jnp.float32))

    w3p = jnp.zeros((H2_PAD, OUT_PAD), jnp.bfloat16).at[:H2, :OUT].set(w3.astype(jnp.bfloat16))
    b3p = jnp.zeros((1, OUT_PAD), jnp.float32).at[0, :OUT].set(b3.astype(jnp.float32))

    # Weights/biases: constant index_map -> resident in VMEM, DMA'd once across the
    # grid; single-buffered (no point double-buffering blocks that never change).
    resident = lambda shape: pl.BlockSpec(
        shape, lambda i: tuple(0 for _ in shape), pipeline_mode=pl.Buffered(1))

    out = pl.pallas_call(
        mlp_kernel,
        out_shape=jax.ShapeDtypeStruct((padded_b, OUT_PAD), jnp.bfloat16),
        grid_spec=pltpu.PrefetchScalarGridSpec(
            num_scalar_prefetch=0,
            grid=(n_tiles,),
            in_specs=[
                pl.BlockSpec((tile, IN_DIM), lambda i: (i, 0)),     # x: tiled over batch
                resident((IN_DIM, H1)),   resident((1, H1)),
                resident((H1, H2_PAD)),   resident((1, H2_PAD)),
                resident((H2_PAD, OUT_PAD)), resident((1, OUT_PAD)),
            ],
            out_specs=pl.BlockSpec((tile, OUT_PAD), lambda i: (i, 0)),
        ),
        compiler_params=pltpu.CompilerParams(
            dimension_semantics=("parallel",),     # shard batch tiles across TCs (v7x)
            vmem_limit_bytes=48 * 1024 * 1024,     # v5e default is 16 MiB; v7x phys 64 MiB
        ),
    )(x, w1p, b1p, w2p, b2p, w3p, b3p)

    # Strip batch padding and lane padding; return f32 logits like the torch module.
    return out[:B, :OUT].astype(jnp.float32)


def init_params(key):
    """Deterministic init mimicking torch.nn.Linear default (U[-1/sqrt(fan_in), +])."""
    ks = jax.random.split(key, 6)

    def linear(kw, kb, fan_in, fan_out):
        bound = 1.0 / jnp.sqrt(fan_in)
        w = jax.random.uniform(kw, (fan_in, fan_out), jnp.float32, -bound, bound)
        b = jax.random.uniform(kb, (fan_out,), jnp.float32, -bound, bound)
        return w, b

    w1, b1 = linear(ks[0], ks[1], IN_DIM, H1)
    w2, b2 = linear(ks[2], ks[3], H1, H2)
    w3, b3 = linear(ks[4], ks[5], H2, OUT)
    return w1, b1, w2, b2, w3, b3


if __name__ == "__main__":
    key = jax.random.PRNGKey(0)
    k_x, k_p = jax.random.split(key)

    B = 8
    x = jax.random.normal(k_x, (B, 1, 28, 28), jnp.float32)  # MNIST-like NCHW
    params = init_params(k_p)

    out = mlp_forward(x, *params)
    out = jax.block_until_ready(out)

    # Sanity check against plain-JAX f32 reference (bf16 kernel -> loosened tolerance).
    w1, b1, w2, b2, w3, b3 = params
    xf = x.reshape(B, -1)
    ref = jnp.maximum(xf @ w1 + b1, 0.0)
    ref = jnp.maximum(ref @ w2 + b2, 0.0)
    ref = ref @ w3 + b3
    assert out.shape == (B, OUT)
    assert jnp.allclose(out, ref, atol=3e-2, rtol=3e-2), (
        f"max abs err {jnp.max(jnp.abs(out - ref))}"
    )

    print("KERNEL_OK")
</pallas_src>

<mosaic_0001>
module attributes {stable_mosaic.version = 11 : i64} {
  func.func @mlp_kernel(%arg0: i32, %arg1: memref<128x784xf32, #tpu.memory_space<vmem>>, %arg2: memref<784x128xbf16, #tpu.memory_space<vmem>>, %arg3: memref<1x128xf32, #tpu.memory_space<vmem>>, %arg4: memref<128x128xbf16, #tpu.memory_space<vmem>>, %arg5: memref<1x128xf32, #tpu.memory_space<vmem>>, %arg6: memref<128x128xbf16, #tpu.memory_space<vmem>>, %arg7: memref<1x128xf32, #tpu.memory_space<vmem>>, %arg8: memref<128x128xbf16, #tpu.memory_space<vmem>>) attributes {dimension_semantics = [#tpu.dimension_semantics<parallel>], iteration_bounds = array<i64: 1>, scalar_prefetch = 0 : i64, scratch_operands = 0 : i64, tpu.core_type = #tpu.core_type<tc>, window_params = [{transform_indices = @transform_0, window_bounds = array<i64: 128, 784>}, {pipeline_mode = #tpu.pipeline_mode<synchronous>, transform_indices = @transform_1, window_bounds = array<i64: 784, 128>}, {pipeline_mode = #tpu.pipeline_mode<synchronous>, transform_indices = @transform_2, window_bounds = array<i64: 1, 128>}, {pipeline_mode = #tpu.pipeline_mode<synchronous>, transform_indices = @transform_3, window_bounds = array<i64: 128, 128>}, {pipeline_mode = #tpu.pipeline_mode<synchronous>, transform_indices = @transform_4, window_bounds = array<i64: 1, 128>}, {pipeline_mode = #tpu.pipeline_mode<synchronous>, transform_indices = @transform_5, window_bounds = array<i64: 128, 128>}, {pipeline_mode = #tpu.pipeline_mode<synchronous>, transform_indices = @transform_6, window_bounds = array<i64: 1, 128>}, {transform_indices = @transform_7, window_bounds = array<i64: 128, 128>}]} {
    %c0 = arith.constant 0 : index
    %c0_0 = arith.constant 0 : index
    %0 = vector.load %arg1[%c0, %c0_0] : memref<128x784xf32, #tpu.memory_space<vmem>>, vector<128x784xf32>
    %1 = arith.truncf %0 : vector<128x784xf32> to vector<128x784xbf16>
    %c0_1 = arith.constant 0 : index
    %c0_2 = arith.constant 0 : index
    %2 = vector.load %arg2[%c0_1, %c0_2] : memref<784x128xbf16, #tpu.memory_space<vmem>>, vector<784x128xbf16>
    %cst = arith.constant dense<0.000000e+00> : vector<128x128xf32>
    %3 = tpu.matmul %1, %2, %cst {dimension_numbers = #tpu.dot_dimension_numbers<[1], [0], [0], [1], [0, 0, 1, 1], [], []>} : vector<128x784xbf16>, vector<784x128xbf16>, vector<128x128xf32> -> vector<128x128xf32>
    %c0_3 = arith.constant 0 : index
    %c0_4 = arith.constant 0 : index
    %4 = vector.load %arg3[%c0_3, %c0_4] : memref<1x128xf32, #tpu.memory_space<vmem>>, vector<1x128xf32>
    %5 = vector.broadcast %4 : vector<1x128xf32> to vector<128x128xf32>
    %6 = arith.addf %3, %5 : vector<128x128xf32>
    %cst_5 = arith.constant 0.000000e+00 : f32
    %7 = vector.broadcast %cst_5 : f32 to vector<128x128xf32>
    %8 = arith.maximumf %6, %7 : vector<128x128xf32>
    %9 = arith.truncf %8 : vector<128x128xf32> to vector<128x128xbf16>
    %c0_6 = arith.constant 0 : index
    %c0_7 = arith.constant 0 : index
    %10 = vector.load %arg4[%c0_6, %c0_7] : memref<128x128xbf16, #tpu.memory_space<vmem>>, vector<128x128xbf16>
    %cst_8 = arith.constant dense<0.000000e+00> : vector<128x128xf32>
    %11 = tpu.matmul %9, %10, %cst_8 {dimension_numbers = #tpu.dot_dimension_numbers<[1], [0], [0], [1], [0, 0, 1, 1], [], []>} : vector<128x128xbf16>, vector<128x128xbf16>, vector<128x128xf32> -> vector<128x128xf32>
    %c0_9 = arith.constant 0 : index
    %c0_10 = arith.constant 0 : index
    %12 = vector.load %arg5[%c0_9, %c0_10] : memref<1x128xf32, #tpu.memory_space<vmem>>, vector<1x128xf32>
    %13 = vector.broadcast %12 : vector<1x128xf32> to vector<128x128xf32>
    %14 = arith.addf %11, %13 : vector<128x128xf32>
    %cst_11 = arith.constant 0.000000e+00 : f32
    %15 = vector.broadcast %cst_11 : f32 to vector<128x128xf32>
    %16 = arith.maximumf %14, %15 : vector<128x128xf32>
    %17 = arith.truncf %16 : vector<128x128xf32> to vector<128x128xbf16>
    %c0_12 = arith.constant 0 : index
    %c0_13 = arith.constant 0 : index
    %18 = vector.load %arg6[%c0_12, %c0_13] : memref<128x128xbf16, #tpu.memory_space<vmem>>, vector<128x128xbf16>
    %cst_14 = arith.constant dense<0.000000e+00> : vector<128x128xf32>
    %19 = tpu.matmul %17, %18, %cst_14 {dimension_numbers = #tpu.dot_dimension_numbers<[1], [0], [0], [1], [0, 0, 1, 1], [], []>} : vector<128x128xbf16>, vector<128x128xbf16>, vector<128x128xf32> -> vector<128x128xf32>
    %c0_15 = arith.constant 0 : index
    %c0_16 = arith.constant 0 : index
    %20 = vector.load %arg7[%c0_15, %c0_16] : memref<1x128xf32, #tpu.memory_space<vmem>>, vector<1x128xf32>
    %21 = vector.broadcast %20 : vector<1x128xf32> to vector<128x128xf32>
    %22 = arith.addf %19, %21 : vector<128x128xf32>
    %23 = arith.truncf %22 : vector<128x128xf32> to vector<128x128xbf16>
    %c0_17 = arith.constant 0 : index
    %c0_18 = arith.constant 0 : index
    %24 = vector.load %arg8[%c0_17, %c0_18] : memref<128x128xbf16, #tpu.memory_space<vmem>>, vector<128x128xbf16>
    tpu.vector_store %arg8[%c0_17, %c0_18], %23 {strides = array<i32>} : memref<128x128xbf16, #tpu.memory_space<vmem>>, vector<128x128xbf16>,
    return
  }
  func.func @transform_0(%arg0: i32) -> (i32, i32) {
    %c0_i32 = arith.constant 0 : i32
    %c0_i32_0 = arith.constant 0 : i32
    return %arg0, %c0_i32 : i32, i32
  }
  func.func @transform_1(%arg0: i32) -> (i32, i32) {
    %c0_i32 = arith.constant 0 : i32
    %c0_i32_0 = arith.constant 0 : i32
    %c0_i32_1 = arith.constant 0 : i32
    return %c0_i32, %c0_i32_0 : i32, i32
  }
  func.func @transform_2(%arg0: i32) -> (i32, i32) {
    %c0_i32 = arith.constant 0 : i32
    %c0_i32_0 = arith.constant 0 : i32
    %c0_i32_1 = arith.constant 0 : i32
    return %c0_i32, %c0_i32_0 : i32, i32
  }
  func.func @transform_3(%arg0: i32) -> (i32, i32) {
    %c0_i32 = arith.constant 0 : i32
    %c0_i32_0 = arith.constant 0 : i32
    %c0_i32_1 = arith.constant 0 : i32
    return %c0_i32, %c0_i32_0 : i32, i32
  }
  func.func @transform_4(%arg0: i32) -> (i32, i32) {
    %c0_i32 = arith.constant 0 : i32
    %c0_i32_0 = arith.constant 0 : i32
    %c0_i32_1 = arith.constant 0 : i32
    return %c0_i32, %c0_i32_0 : i32, i32
  }
  func.func @transform_5(%arg0: i32) -> (i32, i32) {
    %c0_i32 = arith.constant 0 : i32
    %c0_i32_0 = arith.constant 0 : i32
    %c0_i32_1 = arith.constant 0 : i32
    return %c0_i32, %c0_i32_0 : i32, i32
  }
  func.func @transform_6(%arg0: i32) -> (i32, i32) {
    %c0_i32 = arith.constant 0 : i32
    %c0_i32_0 = arith.constant 0 : i32
    %c0_i32_1 = arith.constant 0 : i32
    return %c0_i32, %c0_i32_0 : i32, i32
  }
  func.func @transform_7(%arg0: i32) -> (i32, i32) {
    %c0_i32 = arith.constant 0 : i32
    %c0_i32_0 = arith.constant 0 : i32
    return %arg0, %c0_i32 : i32, i32
  }
}

</mosaic_0001>

<llo_original>
// kernel: tpu_custom_call.1
$region0: #{tpu_custom_call.1}
  #allocation0 [shape = 'u32[]', space=smem, size = 0x4, offset = 0x4, fixed_abs, tag = 'smem constant byte address 0x4 - core index']
  #allocation1 [shape = 'u32[144,128]{1,0:T(1,128)}', space=vmem, size = 0x12000, scoped, tag = 'internal scratch']
  %s0 = inlined_call_operand.vmem [shape: f32[128,784], index: 0, kind: input, shape index: {}]
  %s1 = inlined_call_operand.vmem [shape: bf16[784,128], index: 1, kind: input, shape index: {}]
  %s2 = inlined_call_operand.vmem [shape: f32[1,128], index: 2, kind: input, shape index: {}]
  %s3 = inlined_call_operand.vmem [shape: bf16[128,128], index: 3, kind: input, shape index: {}]
  %s4 = inlined_call_operand.vmem [shape: f32[1,128], index: 4, kind: input, shape index: {}]
  %s5 = inlined_call_operand.vmem [shape: bf16[128,128], index: 5, kind: input, shape index: {}]
  %s6 = inlined_call_operand.vmem [shape: f32[1,128], index: 6, kind: input, shape index: {}]
  %s7 = inlined_call_operand.hbm [shape: bf16[128,128], index: 7, kind: output, shape index: {}]
  %s8 = sld [smem:[#allocation0]]
  $region38: #{tpu_custom_call.1} parent=0
    _
  %s10 = ssub.s32 1, %s8
  %s11 = scalar_select 0, %s10, %s8
  $region1: #{tpu_custom_call.1} parent=0
    #allocation2 [shape = 'u8[32768]{0}', space=vmem, size = 0x8000, scoped, tag = 'output window, operand 0, single buffered']
    #allocation3 [shape = 's32[1]{0}', space=sflag, size = 0x4, scoped, tag = 'scoped memory for tpu_custom_call.1']
    %12 = vsyncpa [#allocation3], 0
    // Predicated region
    $region2: #{tpu_custom_call.1} parent=1 // pred_check
      _
    $region3: #{tpu_custom_call.1} parent=1 // pred_check_branch
      %14 = sbr.rel (0) target = $region5
    $region4: #{tpu_custom_call.1} parent=1 // pred_region
      _
    $region5: #{tpu_custom_call.1} parent=1 // pred_fallthru
      _
    // Predicated region
    $region6: #{tpu_custom_call.1} parent=1 // pred_check
      _
    $region7: #{tpu_custom_call.1} parent=1 // pred_check_branch
      %16 = sbr.rel (0) target = $region9
    $region8: #{tpu_custom_call.1} parent=1 // pred_region
      _
    $region9: #{tpu_custom_call.1} parent=1 // pred_fallthru
      _
    // Predicated region
    $region10: #{tpu_custom_call.1} parent=1 // pred_check
      _
    $region11: #{tpu_custom_call.1} parent=1 // pred_check_branch
      %18 = sbr.rel (0) target = $region13
    $region12: #{tpu_custom_call.1} parent=1 // pred_region
      _
    $region13: #{tpu_custom_call.1} parent=1 // pred_fallthru
      _
    // Predicated region
    $region14: #{tpu_custom_call.1} parent=1 // pred_check
      _
    $region15: #{tpu_custom_call.1} parent=1 // pred_check_branch
      %20 = sbr.rel (0) target = $region17
    $region16: #{tpu_custom_call.1} parent=1 // pred_region
      _
    $region17: #{tpu_custom_call.1} parent=1 // pred_fallthru
      _
    // Predicated region
    $region18: #{tpu_custom_call.1} parent=1 // pred_check
      _
    $region19: #{tpu_custom_call.1} parent=1 // pred_check_branch
      %22 = sbr.rel (0) target = $region21
    $region20: #{tpu_custom_call.1} parent=1 // pred_region
      _
    $region21: #{tpu_custom_call.1} parent=1 // pred_fallthru
      _
    // Predicated region
    $region22: #{tpu_custom_call.1} parent=1 // pred_check
      _
    $region23: #{tpu_custom_call.1} parent=1 // pred_check_branch
      %24 = sbr.rel (0) target = $region25
    $region24: #{tpu_custom_call.1} parent=1 // pred_region
      _
    $region25: #{tpu_custom_call.1} parent=1 // pred_fallthru
      _
    // Predicated region
    $region26: #{tpu_custom_call.1} parent=1 // pred_check
      _
    $region27: #{tpu_custom_call.1} parent=1 // pred_check_branch
      %26 = sbr.rel (0) target = $region29
    $region28: #{tpu_custom_call.1} parent=1 // pred_region
      _
    $region29: #{tpu_custom_call.1} parent=1 // pred_fallthru
      _
    %v28 = vld [vmem:[%s0] sm:$0xff]
    %v29 = vld [vmem:[%s0 + $0x8] sm:$0xff]
    %v30 = vld [vmem:[%s0 + $0x10] sm:$0xff]
    %v31 = vld [vmem:[%s0 + $0x18] sm:$0xff]
    %v32 = vld [vmem:[%s0 + $0x20] sm:$0xff]
    %v33 = vld [vmem:[%s0 + $0x28] sm:$0xff]
    %v34 = vld [vmem:[%s0 + $0x30] sm:$0xff]
    %v35 = vld [vmem:[%s0 + $0x38] sm:$0xff]
    %v36 = vld [vmem:[%s0 + $0x40] sm:$0xff]
    %v37 = vld [vmem:[%s0 + $0x48] sm:$0xff]
    %v38 = vld [vmem:[%s0 + $0x50] sm:$0xff]
    %v39 = vld [vmem:[%s0 + $0x58] sm:$0xff]
    %v40 = vld [vmem:[%s0 + $0x60] sm:$0xff]
    %v41 = vld [vmem:[%s0 + $0x68] sm:$0xff]
    %v42 = vld [vmem:[%s0 + $0x70] sm:$0xff]
    %v43 = vld [vmem:[%s0 + $0x78] sm:$0xff]
    %v44 = vld [vmem:[%s0 + $0x80] sm:$0xff]
    %v45 = vld [vmem:[%s0 + $0x88] sm:$0xff]
    %v46 = vld [vmem:[%s0 + $0x90] sm:$0xff]
    %v47 = vld [vmem:[%s0 + $0x98] sm:$0xff]
    %v48 = vld [vmem:[%s0 + $0xa0] sm:$0xff]
    %v49 = vld [vmem:[%s0 + $0xa8] sm:$0xff]
    %v50 = vld [vmem:[%s0 + $0xb0] sm:$0xff]
    %v51 = vld [vmem:[%s0 + $0xb8] sm:$0xff]
    %v52 = vld [vmem:[%s0 + $0xc0] sm:$0xff]
    %v53 = vld [vmem:[%s0 + $0xc8] sm:$0xff]
    %v54 = vld [vmem:[%s0 + $0xd0] sm:$0xff]
    %v55 = vld [vmem:[%s0 + $0xd8] sm:$0xff]
    %v56 = vld [vmem:[%s0 + $0xe0] sm:$0xff]
    %v57 = vld [vmem:[%s0 + $0xe8] sm:$0xff]
    %v58 = vld [vmem:[%s0 + $0xf0] sm:$0xff]
    %v59 = vld [vmem:[%s0 + $0xf8] sm:$0xff]
    %v60 = vld [vmem:[%s0 + $0x100] sm:$0xff]
    %v61 = vld [vmem:[%s0 + $0x108] sm:$0xff]
    %v62 = vld [vmem:[%s0 + $0x110] sm:$0xff]
    %v63 = vld [vmem:[%s0 + $0x118] sm:$0xff]
    %v64 = vld [vmem:[%s0 + $0x120] sm:$0xff]
    %v65 = vld [vmem:[%s0 + $0x128] sm:$0xff]
    %v66 = vld [vmem:[%s0 + $0x130] sm:$0xff]
    %v67 = vld [vmem:[%s0 + $0x138] sm:$0xff]
    %v68 = vld [vmem:[%s0 + $0x140] sm:$0xff]
    %v69 = vld [vmem:[%s0 + $0x148] sm:$0xff]
    %v70 = vld [vmem:[%s0 + $0x150] sm:$0xff]
    %v71 = vld [vmem:[%s0 + $0x158] sm:$0xff]
    %v72 = vld [vmem:[%s0 + $0x160] sm:$0xff]
    %v73 = vld [vmem:[%s0 + $0x168] sm:$0xff]
    %v74 = vld [vmem:[%s0 + $0x170] sm:$0xff]
    %v75 = vld [vmem:[%s0 + $0x178] sm:$0xff]
    %v76 = vld [vmem:[%s0 + $0x180] sm:$0xff]
    %v77 = vld [vmem:[%s0 + $0x188] sm:$0xff]
    %v78 = vld [vmem:[%s0 + $0x190] sm:$0xff]
    %v79 = vld [vmem:[%s0 + $0x198] sm:$0xff]
    %v80 = vld [vmem:[%s0 + $0x1a0] sm:$0xff]
    %v81 = vld [vmem:[%s0 + $0x1a8] sm:$0xff]
    %v82 = vld [vmem:[%s0 + $0x1b0] sm:$0xff]
    %v83 = vld [vmem:[%s0 + $0x1b8] sm:$0xff]
    %v84 = vld [vmem:[%s0 + $0x1c0] sm:$0xff]
    %v85 = vld [vmem:[%s0 + $0x1c8] sm:$0xff]
    %v86 = vld [vmem:[%s0 + $0x1d0] sm:$0xff]
    %v87 = vld [vmem:[%s0 + $0x1d8] sm:$0xff]
    %v88 = vld [vmem:[%s0 + $0x1e0] sm:$0xff]
    %v89 = vld [vmem:[%s0 + $0x1e8] sm:$0xff]
    %v90 = vld [vmem:[%s0 + $0x1f0] sm:$0xff]
    %v91 = vld [vmem:[%s0 + $0x1f8] sm:$0xff]
    %v92 = vld [vmem:[%s0 + $0x200] sm:$0xff]
    %v93 = vld [vmem:[%s0 + $0x208] sm:$0xff]
    %v94 = vld [vmem:[%s0 + $0x210] sm:$0xff]
    %v95 = vld [vmem:[%s0 + $0x218] sm:$0xff]
    %v96 = vld [vmem:[%s0 + $0x220] sm:$0xff]
    %v97 = vld [vmem:[%s0 + $0x228] sm:$0xff]
    %v98 = vld [vmem:[%s0 + $0x230] sm:$0xff]
    %v99 = vld [vmem:[%s0 + $0x238] sm:$0xff]
    %v100 = vld [vmem:[%s0 + $0x240] sm:$0xff]
    %v101 = vld [vmem:[%s0 + $0x248] sm:$0xff]
    %v102 = vld [vmem:[%s0 + $0x250] sm:$0xff]
    %v103 = vld [vmem:[%s0 + $0x258] sm:$0xff]
    %v104 = vld [vmem:[%s0 + $0x260] sm:$0xff]
    %v105 = vld [vmem:[%s0 + $0x268] sm:$0xff]
    %v106 = vld [vmem:[%s0 + $0x270] sm:$0xff]
    %v107 = vld [vmem:[%s0 + $0x278] sm:$0xff]
    %v108 = vld [vmem:[%s0 + $0x280] sm:$0xff]
    %v109 = vld [vmem:[%s0 + $0x288] sm:$0xff]
    %v110 = vld [vmem:[%s0 + $0x290] sm:$0xff]
    %v111 = vld [vmem:[%s0 + $0x298] sm:$0xff]
    %v112 = vld [vmem:[%s0 + $0x2a0] sm:$0xff]
    %v113 = vld [vmem:[%s0 + $0x2a8] sm:$0xff]
    %v114 = vld [vmem:[%s0 + $0x2b0] sm:$0xff]
    %v115 = vld [vmem:[%s0 + $0x2b8] sm:$0xff]
    %v116 = vld [vmem:[%s0 + $0x2c0] sm:$0xff]
    %v117 = vld [vmem:[%s0 + $0x2c8] sm:$0xff]
    %v118 = vld [vmem:[%s0 + $0x2d0] sm:$0xff]
    %v119 = vld [vmem:[%s0 + $0x2d8] sm:$0xff]
    %v120 = vld [vmem:[%s0 + $0x2e0] sm:$0xff]
    %v121 = vld [vmem:[%s0 + $0x2e8] sm:$0xff]
    %v122 = vld [vmem:[%s0 + $0x2f0] sm:$0xff]
    %v123 = vld [vmem:[%s0 + $0x2f8] sm:$0xff]
    %v124 = vld [vmem:[%s0 + $0x300] sm:$0xff]
    %v125 = vld [vmem:[%s0 + $0x308] sm:$0xff]
    %v126 = vld [vmem:[%s0 + $0x310] sm:$0xff]
    %v127 = vld [vmem:[%s0 + $0x318] sm:$0xff]
    %v128 = vld [vmem:[%s0 + $0x320] sm:$0xff]
    %v129 = vld [vmem:[%s0 + $0x328] sm:$0xff]
    %v130 = vld [vmem:[%s0 + $0x330] sm:$0xff]
    %v131 = vld [vmem:[%s0 + $0x338] sm:$0xff]
    %v132 = vld [vmem:[%s0 + $0x340] sm:$0xff]
    %v133 = vld [vmem:[%s0 + $0x348] sm:$0xff]
    %v134 = vld [vmem:[%s0 + $0x350] sm:$0xff]
    %v135 = vld [vmem:[%s0 + $0x358] sm:$0xff]
    %v136 = vld [vmem:[%s0 + $0x360] sm:$0xff]
    %v137 = vld [vmem:[%s0 + $0x368] sm:$0xff]
    %v138 = vld [vmem:[%s0 + $0x370] sm:$0xff]
    %v139 = vld [vmem:[%s0 + $0x378] sm:$0xff]
    %v140 = vpack.c.bf16 %v35, %v28
    %v141 = vpack.c.bf16 %v36, %v29
    %v142 = vpack.c.bf16 %v37, %v30
    %v143 = vpack.c.bf16 %v38, %v31
    %v144 = vpack.c.bf16 %v39, %v32
    %v145 = vpack.c.bf16 %v40, %v33
    %v146 = vpack.c.bf16 %v41, %v34
    %v147 = vpack.c.bf16 %v49, %v42
    %v148 = vpack.c.bf16 %v50, %v43
    %v149 = vpack.c.bf16 %v51, %v44
    %v150 = vpack.c.bf16 %v52, %v45
    %v151 = vpack.c.bf16 %v53, %v46
    %v152 = vpack.c.bf16 %v54, %v47
    %v153 = vpack.c.bf16 %v55, %v48
    %v154 = vpack.c.bf16 %v63, %v56
    %v155 = vpack.c.bf16 %v64, %v57
    %v156 = vpack.c.bf16 %v65, %v58
    %v157 = vpack.c.bf16 %v66, %v59
    %v158 = vpack.c.bf16 %v67, %v60
    %v159 = vpack.c.bf16 %v68, %v61
    %v160 = vpack.c.bf16 %v69, %v62
    %v161 = vpack.c.bf16 %v77, %v70
    %v162 = vpack.c.bf16 %v78, %v71
    %v163 = vpack.c.bf16 %v79, %v72
    %v164 = vpack.c.bf16 %v80, %v73
    %v165 = vpack.c.bf16 %v81, %v74
    %v166 = vpack.c.bf16 %v82, %v75
    %v167 = vpack.c.bf16 %v83, %v76
    %v168 = vpack.c.bf16 %v91, %v84
    %v169 = vpack.c.bf16 %v92, %v85
    %v170 = vpack.c.bf16 %v93, %v86
    %v171 = vpack.c.bf16 %v94, %v87
    %v172 = vpack.c.bf16 %v95, %v88
    %v173 = vpack.c.bf16 %v96, %v89
    %v174 = vpack.c.bf16 %v97, %v90
    %v175 = vpack.c.bf16 %v105, %v98
    %v176 = vpack.c.bf16 %v106, %v99
    %v177 = vpack.c.bf16 %v107, %v100
    %v178 = vpack.c.bf16 %v108, %v101
    %v179 = vpack.c.bf16 %v109, %v102
    %v180 = vpack.c.bf16 %v110, %v103
    %v181 = vpack.c.bf16 %v111, %v104
    %v182 = vpack.c.bf16 %v119, %v112
    %v183 = vpack.c.bf16 %v120, %v113
    %v184 = vpack.c.bf16 %v121, %v114
    %v185 = vpack.c.bf16 %v122, %v115
    %v186 = vpack.c.bf16 %v123, %v116
    %v187 = vpack.c.bf16 %v124, %v117
    %v188 = vpack.c.bf16 %v125, %v118
    %v189 = vpack.c.bf16 %v133, %v126
    %v190 = vpack.c.bf16 %v134, %v127
    %v191 = vpack.c.bf16 %v135, %v128
    %v192 = vpack.c.bf16 %v136, %v129
    %v193 = vpack.c.bf16 %v137, %v130
    %v194 = vpack.c.bf16 %v138, %v131
    %v195 = vpack.c.bf16 %v139, %v132
    %v196 = vld [vmem:[%s1] sm:$0xf]
    %v197 = vld [vmem:[%s1 + $0x4] sm:$0xf]
    %v198 = vld [vmem:[%s1 + $0x8] sm:$0xf]
    %v199 = vld [vmem:[%s1 + $0xc] sm:$0xf]
    %v200 = vld [vmem:[%s1 + $0x10] sm:$0xf]
    %v201 = vld [vmem:[%s1 + $0x14] sm:$0xf]
    %v202 = vld [vmem:[%s1 + $0x18] sm:$0xf]
    %v203 = vld [vmem:[%s1 + $0x1c] sm:$0xf]
    %v204 = vld [vmem:[%s1 + $0x20] sm:$0xf]
    %v205 = vld [vmem:[%s1 + $0x24] sm:$0xf]
    %v206 = vld [vmem:[%s1 + $0x28] sm:$0xf]
    %v207 = vld [vmem:[%s1 + $0x2c] sm:$0xf]
    %v208 = vld [vmem:[%s1 + $0x30] sm:$0xf]
    %v209 = vld [vmem:[%s1 + $0x34] sm:$0xf]
    %v210 = vld [vmem:[%s1 + $0x38] sm:$0xf]
    %v211 = vld [vmem:[%s1 + $0x3c] sm:$0xf]
    %v212 = vld [vmem:[%s1 + $0x40] sm:$0xf]
    %v213 = vld [vmem:[%s1 + $0x44] sm:$0xf]
    %v214 = vld [vmem:[%s1 + $0x48] sm:$0xf]
    %v215 = vld [vmem:[%s1 + $0x4c] sm:$0xf]
    %v216 = vld [vmem:[%s1 + $0x50] sm:$0xf]
    %v217 = vld [vmem:[%s1 + $0x54] sm:$0xf]
    %v218 = vld [vmem:[%s1 + $0x58] sm:$0xf]
    %v219 = vld [vmem:[%s1 + $0x5c] sm:$0xf]
    %v220 = vld [vmem:[%s1 + $0x60] sm:$0xf]
    %v221 = vld [vmem:[%s1 + $0x64] sm:$0xf]
    %v222 = vld [vmem:[%s1 + $0x68] sm:$0xf]
    %v223 = vld [vmem:[%s1 + $0x6c] sm:$0xf]
    %v224 = vld [vmem:[%s1 + $0x70] sm:$0xf]
    %v225 = vld [vmem:[%s1 + $0x74] sm:$0xf]
    %v226 = vld [vmem:[%s1 + $0x78] sm:$0xf]
    %v227 = vld [vmem:[%s1 + $0x7c] sm:$0xf]
    %v228 = vld [vmem:[%s1 + $0x80] sm:$0xf]
    %v229 = vld [vmem:[%s1 + $0x84] sm:$0xf]
    %v230 = vld [vmem:[%s1 + $0x88] sm:$0xf]
    %v231 = vld [vmem:[%s1 + $0x8c] sm:$0xf]
    %v232 = vld [vmem:[%s1 + $0x90] sm:$0xf]
    %v233 = vld [vmem:[%s1 + $0x94] sm:$0xf]
    %v234 = vld [vmem:[%s1 + $0x98] sm:$0xf]
    %v235 = vld [vmem:[%s1 + $0x9c] sm:$0xf]
    %v236 = vld [vmem:[%s1 + $0xa0] sm:$0xf]
    %v237 = vld [vmem:[%s1 + $0xa4] sm:$0xf]
    %v238 = vld [vmem:[%s1 + $0xa8] sm:$0xf]
    %v239 = vld [vmem:[%s1 + $0xac] sm:$0xf]
    %v240 = vld [vmem:[%s1 + $0xb0] sm:$0xf]
    %v241 = vld [vmem:[%s1 + $0xb4] sm:$0xf]
    %v242 = vld [vmem:[%s1 + $0xb8] sm:$0xf]
    %v243 = vld [vmem:[%s1 + $0xbc] sm:$0xf]
    %v244 = vld [vmem:[%s1 + $0xc0] sm:$0xf]
    %v245 = vld [vmem:[%s1 + $0xc4] sm:$0xf]
    %v246 = vld [vmem:[%s1 + $0xc8] sm:$0xf]
    %v247 = vld [vmem:[%s1 + $0xcc] sm:$0xf]
    %v248 = vld [vmem:[%s1 + $0xd0] sm:$0xf]
    %v249 = vld [vmem:[%s1 + $0xd4] sm:$0xf]
    %v250 = vld [vmem:[%s1 + $0xd8] sm:$0xf]
    %v251 = vld [vmem:[%s1 + $0xdc] sm:$0xf]
    %v252 = vld [vmem:[%s1 + $0xe0] sm:$0xf]
    %v253 = vld [vmem:[%s1 + $0xe4] sm:$0xf]
    %v254 = vld [vmem:[%s1 + $0xe8] sm:$0xf]
    %v255 = vld [vmem:[%s1 + $0xec] sm:$0xf]
    %v256 = vld [vmem:[%s1 + $0xf0] sm:$0xf]
    %v257 = vld [vmem:[%s1 + $0xf4] sm:$0xf]
    %v258 = vld [vmem:[%s1 + $0xf8] sm:$0xf]
    %v259 = vld [vmem:[%s1 + $0xfc] sm:$0xf]
    %v260 = vld [vmem:[%s1 + $0x100] sm:$0xf]
    %v261 = vld [vmem:[%s1 + $0x104] sm:$0xf]
    %v262 = vld [vmem:[%s1 + $0x108] sm:$0xf]
    %v263 = vld [vmem:[%s1 + $0x10c] sm:$0xf]
    %v264 = vld [vmem:[%s1 + $0x110] sm:$0xf]
    %v265 = vld [vmem:[%s1 + $0x114] sm:$0xf]
    %v266 = vld [vmem:[%s1 + $0x118] sm:$0xf]
    %v267 = vld [vmem:[%s1 + $0x11c] sm:$0xf]
    %v268 = vld [vmem:[%s1 + $0x120] sm:$0xf]
    %v269 = vld [vmem:[%s1 + $0x124] sm:$0xf]
    %v270 = vld [vmem:[%s1 + $0x128] sm:$0xf]
    %v271 = vld [vmem:[%s1 + $0x12c] sm:$0xf]
    %v272 = vld [vmem:[%s1 + $0x130] sm:$0xf]
    %v273 = vld [vmem:[%s1 + $0x134] sm:$0xf]
    %v274 = vld [vmem:[%s1 + $0x138] sm:$0xf]
    %v275 = vld [vmem:[%s1 + $0x13c] sm:$0xf]
    %v276 = vld [vmem:[%s1 + $0x140] sm:$0xf]
    %v277 = vld [vmem:[%s1 + $0x144] sm:$0xf]
    %v278 = vld [vmem:[%s1 + $0x148] sm:$0xf]
    %v279 = vld [vmem:[%s1 + $0x14c] sm:$0xf]
    %v280 = vld [vmem:[%s1 + $0x150] sm:$0xf]
    %v281 = vld [vmem:[%s1 + $0x154] sm:$0xf]
    %v282 = vld [vmem:[%s1 + $0x158] sm:$0xf]
    %v283 = vld [vmem:[%s1 + $0x15c] sm:$0xf]
    %v284 = vld [vmem:[%s1 + $0x160] sm:$0xf]
    %v285 = vld [vmem:[%s1 + $0x164] sm:$0xf]
    %v286 = vld [vmem:[%s1 + $0x168] sm:$0xf]
    %v287 = vld [vmem:[%s1 + $0x16c] sm:$0xf]
    %v288 = vld [vmem:[%s1 + $0x170] sm:$0xf]
    %v289 = vld [vmem:[%s1 + $0x174] sm:$0xf]
    %v290 = vld [vmem:[%s1 + $0x178] sm:$0xf]
    %v291 = vld [vmem:[%s1 + $0x17c] sm:$0xf]
    %v292 = vld [vmem:[%s1 + $0x180] sm:$0xf]
    %v293 = vld [vmem:[%s1 + $0x184] sm:$0xf]
    %v294 = vld [vmem:[%s2] sm:$0x1]
    %v296 = vlaneseq
    %v297 = vshrl.u32 %v296, 7
    %v298 = vsub.s32 0, %v297
    %v299 = vrot.slane %v294, %v298
    %v399 = vunpack.c.l.b16 %v196
    %v400 = vunpack.c.l.b16 %v197
    %v401 = vunpack.c.l.b16 %v198
    %v402 = vunpack.c.l.b16 %v199
    %v403 = vunpack.c.l.b16 %v200
    %v404 = vunpack.c.l.b16 %v201
    %v405 = vunpack.c.l.b16 %v202
    %v406 = vunpack.c.l.b16 %v203
    %v407 = vunpack.c.l.b16 %v204
    %v408 = vunpack.c.l.b16 %v205
    %v409 = vunpack.c.l.b16 %v206
    %v410 = vunpack.c.l.b16 %v207
    %v411 = vunpack.c.l.b16 %v208
    %v412 = vunpack.c.l.b16 %v209
    %v413 = vunpack.c.l.b16 %v210
    %v414 = vunpack.c.l.b16 %v211
    %v415 = vunpack.c.l.b16 %v212
    %v416 = vunpack.c.l.b16 %v213
    %v417 = vunpack.c.l.b16 %v214
    %v418 = vunpack.c.l.b16 %v215
    %v419 = vunpack.c.l.b16 %v216
    %v420 = vunpack.c.l.b16 %v217
    %v421 = vunpack.c.l.b16 %v218
    %v422 = vunpack.c.l.b16 %v219
    %v423 = vunpack.c.l.b16 %v220
    %v424 = vunpack.c.l.b16 %v221
    %v425 = vunpack.c.l.b16 %v222
    %v426 = vunpack.c.l.b16 %v223
    %v427 = vunpack.c.l.b16 %v224
    %v428 = vunpack.c.l.b16 %v225
    %v429 = vunpack.c.l.b16 %v226
    %v430 = vunpack.c.l.b16 %v227
    %v431 = vunpack.c.l.b16 %v228
    %v432 = vunpack.c.l.b16 %v229
    %v433 = vunpack.c.l.b16 %v230
    %v434 = vunpack.c.l.b16 %v231
    %v435 = vunpack.c.l.b16 %v232
    %v436 = vunpack.c.l.b16 %v233
    %v437 = vunpack.c.l.b16 %v234
    %v438 = vunpack.c.l.b16 %v235
    %v439 = vunpack.c.l.b16 %v236
    %v440 = vunpack.c.l.b16 %v237
    %v441 = vunpack.c.l.b16 %v238
    %v442 = vunpack.c.l.b16 %v239
    %v443 = vunpack.c.l.b16 %v240
    %v444 = vunpack.c.l.b16 %v241
    %v445 = vunpack.c.l.b16 %v242
    %v446 = vunpack.c.l.b16 %v243
    %v447 = vunpack.c.l.b16 %v244
    %v448 = vunpack.c.l.b16 %v245
    %v449 = vunpack.c.l.b16 %v246
    %v450 = vunpack.c.l.b16 %v247
    %v451 = vunpack.c.l.b16 %v248
    %v452 = vunpack.c.l.b16 %v249
    %v453 = vunpack.c.l.b16 %v250
    %v454 = vunpack.c.l.b16 %v251
    %v455 = vunpack.c.l.b16 %v252
    %v456 = vunpack.c.l.b16 %v253
    %v457 = vunpack.c.l.b16 %v254
    %v458 = vunpack.c.l.b16 %v255
    %v459 = vunpack.c.l.b16 %v256
    %v460 = vunpack.c.l.b16 %v257
    %v461 = vunpack.c.l.b16 %v258
    %v462 = vunpack.c.l.b16 %v259
    %v463 = vunpack.c.l.b16 %v260
    %v464 = vunpack.c.l.b16 %v261
    %v465 = vunpack.c.l.b16 %v262
    %v466 = vunpack.c.l.b16 %v263
    %v467 = vunpack.c.l.b16 %v264
    %v468 = vunpack.c.l.b16 %v265
    %v469 = vunpack.c.l.b16 %v266
    %v470 = vunpack.c.l.b16 %v267
    %v471 = vunpack.c.l.b16 %v268
    %v472 = vunpack.c.l.b16 %v269
    %v473 = vunpack.c.l.b16 %v270
    %v474 = vunpack.c.l.b16 %v271
    %v475 = vunpack.c.l.b16 %v272
    %v476 = vunpack.c.l.b16 %v273
    %v477 = vunpack.c.l.b16 %v274
    %v478 = vunpack.c.l.b16 %v275
    %v479 = vunpack.c.l.b16 %v276
    %v480 = vunpack.c.l.b16 %v277
    %v481 = vunpack.c.l.b16 %v278
    %v482 = vunpack.c.l.b16 %v279
    %v483 = vunpack.c.l.b16 %v280
    %v484 = vunpack.c.l.b16 %v281
    %v485 = vunpack.c.l.b16 %v282
    %v486 = vunpack.c.l.b16 %v283
    %v487 = vunpack.c.l.b16 %v284
    %v488 = vunpack.c.l.b16 %v285
    %v489 = vunpack.c.l.b16 %v286
    %v490 = vunpack.c.l.b16 %v287
    %v491 = vunpack.c.l.b16 %v288
    %v492 = vunpack.c.l.b16 %v289
    %v493 = vunpack.c.l.b16 %v290
    %v494 = vunpack.c.l.b16 %v291
    %v495 = vunpack.c.l.b16 %v292
    %v496 = vunpack.c.l.b16 %v293
    %v497 = vpack.c.b16 %v400, %v399
    %v498 = vpack.c.b16 %v402, %v401
    %v499 = vpack.c.b16 %v404, %v403
    %v500 = vpack.c.b16 %v406, %v405
    %v501 = vpack.c.b16 %v408, %v407
    %v502 = vpack.c.b16 %v410, %v409
    %v503 = vpack.c.b16 %v412, %v411
    %v504 = vpack.c.b16 %v414, %v413
    %v505 = vpack.c.b16 %v416, %v415
    %v506 = vpack.c.b16 %v418, %v417
    %v507 = vpack.c.b16 %v420, %v419
    %v508 = vpack.c.b16 %v422, %v421
    %v509 = vpack.c.b16 %v424, %v423
    %v510 = vpack.c.b16 %v426, %v425
    %v511 = vpack.c.b16 %v428, %v427
    %v512 = vpack.c.b16 %v430, %v429
    %v513 = vpack.c.b16 %v432, %v431
    %v514 = vpack.c.b16 %v434, %v433
    %v515 = vpack.c.b16 %v436, %v435
    %v516 = vpack.c.b16 %v438, %v437
    %v517 = vpack.c.b16 %v440, %v439
    %v518 = vpack.c.b16 %v442, %v441
    %v519 = vpack.c.b16 %v444, %v443
    %v520 = vpack.c.b16 %v446, %v445
    %v521 = vpack.c.b16 %v448, %v447
    %v522 = vpack.c.b16 %v450, %v449
    %v523 = vpack.c.b16 %v452, %v451
    %v524 = vpack.c.b16 %v454, %v453
    %v525 = vpack.c.b16 %v456, %v455
    %v526 = vpack.c.b16 %v458, %v457
    %v527 = vpack.c.b16 %v460, %v459
    %v528 = vpack.c.b16 %v462, %v461
    %v529 = vpack.c.b16 %v464, %v463
    %v530 = vpack.c.b16 %v466, %v465
    %v531 = vpack.c.b16 %v468, %v467
    %v532 = vpack.c.b16 %v470, %v469
    %v533 = vpack.c.b16 %v472, %v471
    %v534 = vpack.c.b16 %v474, %v473
    %v535 = vpack.c.b16 %v476, %v475
    %v536 = vpack.c.b16 %v478, %v477
    %v537 = vpack.c.b16 %v480, %v479
    %v538 = vpack.c.b16 %v482, %v481
    %v539 = vpack.c.b16 %v484, %v483
    %v540 = vpack.c.b16 %v486, %v485
    %v541 = vpack.c.b16 %v488, %v487
    %v542 = vpack.c.b16 %v490, %v489
    %v543 = vpack.c.b16 %v492, %v491
    %v544 = vpack.c.b16 %v494, %v493
    %v545 = vpack.c.b16 %v496, %v495
    %vm595 = vcmask 130048
    %v597 = vsel %vm595, %v146, 0
    %v600 = vsel %vm595, %v153, 0
    %v603 = vsel %vm595, %v160, 0
    %v606 = vsel %vm595, %v167, 0
    %v609 = vsel %vm595, %v174, 0
    %v612 = vsel %vm595, %v181, 0
    %v615 = vsel %vm595, %v188, 0
    %v618 = vsel %vm595, %v195, 0
    %620 = vmatprep.subr.bf16.mxu0 0
    %621 = vmatpush1.bf16.msra.mxu0 %v497
    %622 = vmatprep.subr.bf16.mxu0 0
    %623 = vmatpush1.bf16.msra.mxu0 %v498
    %624 = vmatprep.subr.bf16.mxu0 0
    %625 = vmatpush1.bf16.msra.mxu0 %v499
    %626 = vmatprep.subr.bf16.mxu0 0
    %627 = vmatpush1.bf16.msra.mxu0 %v500
    %628 = vmatprep.subr.bf16.mxu0 0
    %629 = vmatpush1.bf16.msra.mxu0 %v501
    %630 = vmatprep.subr.bf16.mxu0 0
    %631 = vmatpush1.bf16.msra.mxu0 %v502
    %632 = vmatprep.subr.bf16.mxu0 0
    %633 = vmatpush1.bf16.msra.mxu0 %v503
    %634 = vmatprep.subr.bf16.mxu0 0
    %635 = vmatpush1.bf16.msra.mxu0 %v504
    %636 = vmatprep.subr.bf16.mxu0 0
    %637 = vmatpush1.bf16.msra.mxu0 %v505
    %638 = vmatprep.subr.bf16.mxu0 0
    %639 = vmatpush1.bf16.msra.mxu0 %v506
    %640 = vmatprep.subr.bf16.mxu0 0
    %641 = vmatpush1.bf16.msra.mxu0 %v507
    %642 = vmatprep.subr.bf16.mxu0 0
    %643 = vmatpush1.bf16.msra.mxu0 %v508
    %644 = vmatprep.subr.bf16.mxu0 0
    %645 = vmatpush1.bf16.msra.mxu0 %v509
    %646 = vmatprep.subr.bf16.mxu0 0
    %647 = vmatpush1.bf16.msra.mxu0 %v510
    %648 = vmatprep.subr.bf16.mxu0 0
    %649 = vmatpush1.bf16.msra.mxu0 %v511
    %650 = vmatprep.subr.bf16.mxu0 0
    %651 = vmatpush1.bf16.msra.mxu0 %v512
    %652 = vmatprep.mubr.bf16.mxu0 %v141
    %653 = vmatmul.mubr.bf16.gmra.mrb[0].mxu0 %v140
    %v654 = vpop.f32.mrb[0].mxu0
    %v655 = vadd.f32 %v299, %v654
    %v656 = vpop.f32.mrb[0].mxu0
    %v657 = vpop.f32.mrb[0].mxu0
    %v658 = vadd.f32 %v299, %v657
    %v659 = vpop.f32.mrb[0].mxu0
    %660 = vmatprep.mubr.bf16.mxu0 %v148
    %661 = vmatmul.mubr.bf16.gmra.mrb[0].mxu0 %v147
    %v662 = vpop.f32.mrb[0].mxu0
    %v663 = vadd.f32 %v299, %v662
    %v664 = vpop.f32.mrb[0].mxu0
    %v665 = vpop.f32.mrb[0].mxu0
    %v666 = vadd.f32 %v299, %v665
    %v667 = vpop.f32.mrb[0].mxu0
    %668 = vmatprep.mubr.bf16.mxu0 %v155
    %669 = vmatmul.mubr.bf16.gmra.mrb[0].mxu0 %v154
    %v670 = vpop.f32.mrb[0].mxu0
    %v671 = vadd.f32 %v299, %v670
    %v672 = vpop.f32.mrb[0].mxu0
    %v673 = vpop.f32.mrb[0].mxu0
    %v674 = vadd.f32 %v299, %v673
    %v675 = vpop.f32.mrb[0].mxu0
    %676 = vmatprep.mubr.bf16.mxu0 %v162
    %677 = vmatmul.mubr.bf16.gmra.mrb[0].mxu0 %v161
    %v678 = vpop.f32.mrb[0].mxu0
    %v679 = vadd.f32 %v299, %v678
    %v680 = vpop.f32.mrb[0].mxu0
    %v681 = vpop.f32.mrb[0].mxu0
    %v682 = vadd.f32 %v299, %v681
    %v683 = vpop.f32.mrb[0].mxu0
    %684 = vmatprep.mubr.bf16.mxu0 %v169
    %685 = vmatmul.mubr.bf16.gmra.mrb[0].mxu0 %v168
    %v686 = vpop.f32.mrb[0].mxu0
    %v687 = vadd.f32 %v299, %v686
    %v688 = vpop.f32.mrb[0].mxu0
    %v689 = vpop.f32.mrb[0].mxu0
    %v690 = vadd.f32 %v299, %v689
    %v691 = vpop.f32.mrb[0].mxu0
    %692 = vmatprep.mubr.bf16.mxu0 %v176
    %693 = vmatmul.mubr.bf16.gmra.mrb[0].mxu0 %v175
    %v694 = vpop.f32.mrb[0].mxu0
    %v695 = vadd.f32 %v299, %v694
    %v696 = vpop.f32.mrb[0].mxu0
    %v697 = vpop.f32.mrb[0].mxu0
    %v698 = vadd.f32 %v299, %v697
    %v699 = vpop.f32.mrb[0].mxu0
    %700 = vmatprep.mubr.bf16.mxu0 %v183
    %701 = vmatmul.mubr.bf16.gmra.mrb[0].mxu0 %v182
    %v702 = vpop.f32.mrb[0].mxu0
    %v703 = vadd.f32 %v299, %v702
    %v704 = vpop.f32.mrb[0].mxu0
    %v705 = vpop.f32.mrb[0].mxu0
    %v706 = vadd.f32 %v299, %v705
    %v707 = vpop.f32.mrb[0].mxu0
    %708 = vmatprep.mubr.bf16.mxu0 %v190
    %709 = vmatmul.mubr.bf16.gmra.mrb[0].mxu0 %v189
    %v710 = vpop.f32.mrb[0].mxu0
    %v711 = vadd.f32 %v299, %v710
    %v712 = vpop.f32.mrb[0].mxu0
    %v713 = vpop.f32.mrb[0].mxu0
    %v714 = vadd.f32 %v299, %v713
    %v715 = vpop.f32.mrb[0].mxu0
    %716 = vdwg.mxu0
    %717 = vmatprep.subr.bf16.mxu0 0
    %718 = vmatpush1.bf16.msra.mxu0 %v513
    %719 = vmatprep.subr.bf16.mxu0 0
    %720 = vmatpush1.bf16.msra.mxu0 %v514
    %721 = vmatprep.subr.bf16.mxu0 0
    %722 = vmatpush1.bf16.msra.mxu0 %v515
    %723 = vmatprep.subr.bf16.mxu0 0
    %724 = vmatpush1.bf16.msra.mxu0 %v516
    %725 = vmatprep.subr.bf16.mxu0 0
    %726 = vmatpush1.bf16.msra.mxu0 %v517
    %727 = vmatprep.subr.bf16.mxu0 0
    %728 = vmatpush1.bf16.msra.mxu0 %v518
    %729 = vmatprep.subr.bf16.mxu0 0
    %730 = vmatpush1.bf16.msra.mxu0 %v519
    %731 = vmatprep.subr.bf16.mxu0 0
    %732 = vmatpush1.bf16.msra.mxu0 %v520
    %733 = vmatprep.subr.bf16.mxu0 0
    %734 = vmatpush1.bf16.msra.mxu0 %v521
    %735 = vmatprep.subr.bf16.mxu0 0
    %736 = vmatpush1.bf16.msra.mxu0 %v522
    %737 = vmatprep.subr.bf16.mxu0 0
    %738 = vmatpush1.bf16.msra.mxu0 %v523
    %739 = vmatprep.subr.bf16.mxu0 0
    %740 = vmatpush1.bf16.msra.mxu0 %v524
    %741 = vmatprep.subr.bf16.mxu0 0
    %742 = vmatpush1.bf16.msra.mxu0 %v525
    %743 = vmatprep.subr.bf16.mxu0 0
    %744 = vmatpush1.bf16.msra.mxu0 %v526
    %745 = vmatprep.subr.bf16.mxu0 0
    %746 = vmatpush1.bf16.msra.mxu0 %v527
    %747 = vmatprep.subr.bf16.mxu0 0
    %748 = vmatpush1.bf16.msra.mxu0 %v528
    %749 = vmatprep.mubr.bf16.mxu0 %v143
    %750 = vmatmul.mubr.bf16.gmra.mrb[0].mxu0 %v142
    %v751 = vpop.f32.mrb[0].mxu0
    %v752 = vadd.f32 %v655, %v751
    %v753 = vpop.f32.mrb[0].mxu0
    %v754 = vpop.f32.mrb[0].mxu0
    %v755 = vadd.f32 %v658, %v754
    %v756 = vpop.f32.mrb[0].mxu0
    %757 = vmatprep.mubr.bf16.mxu0 %v150
    %758 = vmatmul.mubr.bf16.gmra.mrb[0].mxu0 %v149
    %v759 = vpop.f32.mrb[0].mxu0
    %v760 = vadd.f32 %v663, %v759
    %v761 = vpop.f32.mrb[0].mxu0
    %v762 = vpop.f32.mrb[0].mxu0
    %v763 = vadd.f32 %v666, %v762
    %v764 = vpop.f32.mrb[0].mxu0
    %765 = vmatprep.mubr.bf16.mxu0 %v157
    %766 = vmatmul.mubr.bf16.gmra.mrb[0].mxu0 %v156
    %v767 = vpop.f32.mrb[0].mxu0
    %v768 = vadd.f32 %v671, %v767
    %v769 = vpop.f32.mrb[0].mxu0
    %v770 = vpop.f32.mrb[0].mxu0
    %v771 = vadd.f32 %v674, %v770
    %v772 = vpop.f32.mrb[0].mxu0
    %773 = vmatprep.mubr.bf16.mxu0 %v164
    %774 = vmatmul.mubr.bf16.gmra.mrb[0].mxu0 %v163
    %v775 = vpop.f32.mrb[0].mxu0
    %v776 = vadd.f32 %v679, %v775
    %v777 = vpop.f32.mrb[0].mxu0
    %v778 = vpop.f32.mrb[0].mxu0
    %v779 = vadd.f32 %v682, %v778
    %v780 = vpop.f32.mrb[0].mxu0
    %781 = vmatprep.mubr.bf16.mxu0 %v171
    %782 = vmatmul.mubr.bf16.gmra.mrb[0].mxu0 %v170
    %v783 = vpop.f32.mrb[0].mxu0
    %v784 = vadd.f32 %v687, %v783
    %v785 = vpop.f32.mrb[0].mxu0
    %v786 = vpop.f32.mrb[0].mxu0
    %v787 = vadd.f32 %v690, %v786
    %v788 = vpop.f32.mrb[0].mxu0
    %789 = vmatprep.mubr.bf16.mxu0 %v178
    %790 = vmatmul.mubr.bf16.gmra.mrb[0].mxu0 %v177
    %v791 = vpop.f32.mrb[0].mxu0
    %v792 = vadd.f32 %v695, %v791
    %v793 = vpop.f32.mrb[0].mxu0
    %v794 = vpop.f32.mrb[0].mxu0
    %v795 = vadd.f32 %v698, %v794
    %v796 = vpop.f32.mrb[0].mxu0
    %797 = vmatprep.mubr.bf16.mxu0 %v185
    %798 = vmatmul.mubr.bf16.gmra.mrb[0].mxu0 %v184
    %v799 = vpop.f32.mrb[0].mxu0
    %v800 = vadd.f32 %v703, %v799
    %v801 = vpop.f32.mrb[0].mxu0
    %v802 = vpop.f32.mrb[0].mxu0
    %v803 = vadd.f32 %v706, %v802
    %v804 = vpop.f32.mrb[0].mxu0
    %805 = vmatprep.mubr.bf16.mxu0 %v192
    %806 = vmatmul.mubr.bf16.gmra.mrb[0].mxu0 %v191
    %v807 = vpop.f32.mrb[0].mxu0
    %v808 = vadd.f32 %v711, %v807
    %v809 = vpop.f32.mrb[0].mxu0
    %v810 = vpop.f32.mrb[0].mxu0
    %v811 = vadd.f32 %v714, %v810
    %v812 = vpop.f32.mrb[0].mxu0
    %813 = vdwg.mxu0
    %814 = vmatprep.subr.bf16.mxu0 0
    %815 = vmatpush1.bf16.msra.mxu0 %v529
    %816 = vmatprep.subr.bf16.mxu0 0
    %817 = vmatpush1.bf16.msra.mxu0 %v530
    %818 = vmatprep.subr.bf16.mxu0 0
    %819 = vmatpush1.bf16.msra.mxu0 %v531
    %820 = vmatprep.subr.bf16.mxu0 0
    %821 = vmatpush1.bf16.msra.mxu0 %v532
    %822 = vmatprep.subr.bf16.mxu0 0
    %823 = vmatpush1.bf16.msra.mxu0 %v533
    %824 = vmatprep.subr.bf16.mxu0 0
    %825 = vmatpush1.bf16.msra.mxu0 %v534
    %826 = vmatprep.subr.bf16.mxu0 0
    %827 = vmatpush1.bf16.msra.mxu0 %v535
    %828 = vmatprep.subr.bf16.mxu0 0
    %829 = vmatpush1.bf16.msra.mxu0 %v536
    %830 = vmatprep.subr.bf16.mxu0 0
    %831 = vmatpush1.bf16.msra.mxu0 %v537
    %832 = vmatprep.subr.bf16.mxu0 0
    %833 = vmatpush1.bf16.msra.mxu0 %v538
    %834 = vmatprep.subr.bf16.mxu0 0
    %835 = vmatpush1.bf16.msra.mxu0 %v539
    %836 = vmatprep.subr.bf16.mxu0 0
    %837 = vmatpush1.bf16.msra.mxu0 %v540
    %838 = vmatprep.subr.bf16.mxu0 0
    %839 = vmatpush1.bf16.msra.mxu0 %v541
    %840 = vmatprep.subr.bf16.mxu0 0
    %841 = vmatpush1.bf16.msra.mxu0 %v542
    %842 = vmatprep.subr.bf16.mxu0 0
    %843 = vmatpush1.bf16.msra.mxu0 %v543
    %844 = vmatprep.subr.bf16.mxu0 0
    %845 = vmatpush1.bf16.msra.mxu0 %v544
    %846 = vmatprep.mubr.bf16.mxu0 %v145
    %847 = vmatmul.mubr.bf16.gmra.mrb[0].mxu0 %v144
    %v848 = vpop.f32.mrb[0].mxu0
    %v849 = vadd.f32 %v752, %v848
    %v850 = vpop.f32.mrb[0].mxu0
    %v851 = vpop.f32.mrb[0].mxu0
    %v852 = vadd.f32 %v755, %v851
    %v853 = vpop.f32.mrb[0].mxu0
    %854 = vmatprep.mubr.bf16.mxu0 %v152
    %855 = vmatmul.mubr.bf16.gmra.mrb[0].mxu0 %v151
    %v856 = vpop.f32.mrb[0].mxu0
    %v857 = vadd.f32 %v760, %v856
    %v858 = vpop.f32.mrb[0].mxu0
    %v859 = vpop.f32.mrb[0].mxu0
    %v860 = vadd.f32 %v763, %v859
    %v861 = vpop.f32.mrb[0].mxu0
    %862 = vmatprep.mubr.bf16.mxu0 %v159
    %863 = vmatmul.mubr.bf16.gmra.mrb[0].mxu0 %v158
    %v864 = vpop.f32.mrb[0].mxu0
    %v865 = vadd.f32 %v768, %v864
    %v866 = vpop.f32.mrb[0].mxu0
    %v867 = vpop.f32.mrb[0].mxu0
    %v868 = vadd.f32 %v771, %v867
    %v869 = vpop.f32.mrb[0].mxu0
    %870 = vmatprep.mubr.bf16.mxu0 %v166
    %871 = vmatmul.mubr.bf16.gmra.mrb[0].mxu0 %v165
    %v872 = vpop.f32.mrb[0].mxu0
    %v873 = vadd.f32 %v776, %v872
    %v874 = vpop.f32.mrb[0].mxu0
    %v875 = vpop.f32.mrb[0].mxu0
    %v876 = vadd.f32 %v779, %v875
    %v877 = vpop.f32.mrb[0].mxu0
    %878 = vmatprep.mubr.bf16.mxu0 %v173
    %879 = vmatmul.mubr.bf16.gmra.mrb[0].mxu0 %v172
    %v880 = vpop.f32.mrb[0].mxu0
    %v881 = vadd.f32 %v784, %v880
    %v882 = vpop.f32.mrb[0].mxu0
    %v883 = vpop.f32.mrb[0].mxu0
    %v884 = vadd.f32 %v787, %v883
    %v885 = vpop.f32.mrb[0].mxu0
    %886 = vmatprep.mubr.bf16.mxu0 %v180
    %887 = vmatmul.mubr.bf16.gmra.mrb[0].mxu0 %v179
    %v888 = vpop.f32.mrb[0].mxu0
    %v889 = vadd.f32 %v792, %v888
    %v890 = vpop.f32.mrb[0].mxu0
    %v891 = vpop.f32.mrb[0].mxu0
    %v892 = vadd.f32 %v795, %v891
    %v893 = vpop.f32.mrb[0].mxu0
    %894 = vmatprep.mubr.bf16.mxu0 %v187
    %895 = vmatmul.mubr.bf16.gmra.mrb[0].mxu0 %v186
    %v896 = vpop.f32.mrb[0].mxu0
    %v897 = vadd.f32 %v800, %v896
    %v898 = vpop.f32.mrb[0].mxu0
    %v899 = vpop.f32.mrb[0].mxu0
    %v900 = vadd.f32 %v803, %v899
    %v901 = vpop.f32.mrb[0].mxu0
    %902 = vmatprep.mubr.bf16.mxu0 %v194
    %903 = vmatmul.mubr.bf16.gmra.mrb[0].mxu0 %v193
    %v904 = vpop.f32.mrb[0].mxu0
    %v905 = vadd.f32 %v808, %v904
    %v906 = vpop.f32.mrb[0].mxu0
    %v907 = vpop.f32.mrb[0].mxu0
    %v908 = vadd.f32 %v811, %v907
    %v909 = vpop.f32.mrb[0].mxu0
    %910 = vdwg.mxu0
    %911 = vmatprep.subr.bf16.mxu0 0
    %912 = vmatpush1.bf16.msra.mxu0 %v545
    %913 = vmatprep.subr.bf16.mxu0 0
    %914 = vmatpush1.bf16.msra.mxu0 0
    %915 = vmatprep.subr.bf16.mxu0 0
    %916 = vmatpush1.bf16.msra.mxu0 0
    %917 = vmatprep.subr.bf16.mxu0 0
    %918 = vmatpush1.bf16.msra.mxu0 0
    %919 = vmatprep.subr.bf16.mxu0 0
    %920 = vmatpush1.bf16.msra.mxu0 0
    %921 = vmatprep.subr.bf16.mxu0 0
    %922 = vmatpush1.bf16.msra.mxu0 0
    %923 = vmatprep.subr.bf16.mxu0 0
    %924 = vmatpush1.bf16.msra.mxu0 0
    %925 = vmatprep.subr.bf16.mxu0 0
    %926 = vmatpush1.bf16.msra.mxu0 0
    %927 = vmatprep.subr.bf16.mxu0 0
    %928 = vmatpush1.bf16.msra.mxu0 0
    %929 = vmatprep.subr.bf16.mxu0 0
    %930 = vmatpush1.bf16.msra.mxu0 0
    %931 = vmatprep.subr.bf16.mxu0 0
    %932 = vmatpush1.bf16.msra.mxu0 0
    %933 = vmatprep.subr.bf16.mxu0 0
    %934 = vmatpush1.bf16.msra.mxu0 0
    %935 = vmatprep.subr.bf16.mxu0 0
    %936 = vmatpush1.bf16.msra.mxu0 0
    %937 = vmatprep.subr.bf16.mxu0 0
    %938 = vmatpush1.bf16.msra.mxu0 0
    %939 = vmatprep.subr.bf16.mxu0 0
    %940 = vmatpush1.bf16.msra.mxu0 0
    %941 = vmatprep.subr.bf16.mxu0 0
    %942 = vmatpush1.bf16.msra.mxu0 0
    %943 = vmatprep.mubr.bf16.mxu0 0
    %944 = vmatmul.mubr.bf16.gmra.mrb[0].mxu0 %v597
    %v945 = vpop.f32.mrb[0].mxu0
    %v946 = vadd.f32 %v849, %v945
    %v947 = vpop.f32.mrb[0].mxu0
    %v948 = vpop.f32.mrb[0].mxu0
    %v949 = vadd.f32 %v852, %v948
    %v950 = vpop.f32.mrb[0].mxu0
    %951 = vmatprep.mubr.bf16.mxu0 0
    %952 = vmatmul.mubr.bf16.gmra.mrb[0].mxu0 %v600
    %v953 = vpop.f32.mrb[0].mxu0
    %v954 = vadd.f32 %v857, %v953
    %v955 = vpop.f32.mrb[0].mxu0
    %v956 = vpop.f32.mrb[0].mxu0
    %v957 = vadd.f32 %v860, %v956
    %v958 = vpop.f32.mrb[0].mxu0
    %959 = vmatprep.mubr.bf16.mxu0 0
    %960 = vmatmul.mubr.bf16.gmra.mrb[0].mxu0 %v603
    %v961 = vpop.f32.mrb[0].mxu0
    %v962 = vadd.f32 %v865, %v961
    %v963 = vpop.f32.mrb[0].mxu0
    %v964 = vpop.f32.mrb[0].mxu0
    %v965 = vadd.f32 %v868, %v964
    %v966 = vpop.f32.mrb[0].mxu0
    %967 = vmatprep.mubr.bf16.mxu0 0
    %968 = vmatmul.mubr.bf16.gmra.mrb[0].mxu0 %v606
    %v969 = vpop.f32.mrb[0].mxu0
    %v970 = vadd.f32 %v873, %v969
    %v971 = vpop.f32.mrb[0].mxu0
    %v972 = vpop.f32.mrb[0].mxu0
    %v973 = vadd.f32 %v876, %v972
    %v974 = vpop.f32.mrb[0].mxu0
    %975 = vmatprep.mubr.bf16.mxu0 0
    %976 = vmatmul.mubr.bf16.gmra.mrb[0].mxu0 %v609
    %v977 = vpop.f32.mrb[0].mxu0
    %v978 = vadd.f32 %v881, %v977
    %v979 = vpop.f32.mrb[0].mxu0
    %v980 = vpop.f32.mrb[0].mxu0
    %v981 = vadd.f32 %v884, %v980
    %v982 = vpop.f32.mrb[0].mxu0
    %983 = vmatprep.mubr.bf16.mxu0 0
    %984 = vmatmul.mubr.bf16.gmra.mrb[0].mxu0 %v612
    %v985 = vpop.f32.mrb[0].mxu0
    %v986 = vadd.f32 %v889, %v985
    %v987 = vpop.f32.mrb[0].mxu0
    %v988 = vpop.f32.mrb[0].mxu0
    %v989 = vadd.f32 %v892, %v988
    %v990 = vpop.f32.mrb[0].mxu0
    %991 = vmatprep.mubr.bf16.mxu0 0
    %992 = vmatmul.mubr.bf16.gmra.mrb[0].mxu0 %v615
    %v993 = vpop.f32.mrb[0].mxu0
    %v994 = vadd.f32 %v897, %v993
    %v995 = vpop.f32.mrb[0].mxu0
    %v996 = vpop.f32.mrb[0].mxu0
    %v997 = vadd.f32 %v900, %v996
    %v998 = vpop.f32.mrb[0].mxu0
    %999 = vmatprep.mubr.bf16.mxu0 0
    %1000 = vmatmul.mubr.bf16.gmra.mrb[0].mxu0 %v618
    %v1001 = vpop.f32.mrb[0].mxu0
    %v1002 = vadd.f32 %v905, %v1001
    %v1003 = vpop.f32.mrb[0].mxu0
    %v1004 = vpop.f32.mrb[0].mxu0
    %v1005 = vadd.f32 %v908, %v1004
    %v1006 = vpop.f32.mrb[0].mxu0
    %1007 = vdwg.mxu0
    %v1008 = vmax.f32 %v946, 0.0
    %v1009 = vmax.f32 %v949, 0.0
    %v1010 = vmax.f32 %v954, 0.0
    %v1011 = vmax.f32 %v957, 0.0
    %v1012 = vmax.f32 %v962, 0.0
    %v1013 = vmax.f32 %v965, 0.0
    %v1014 = vmax.f32 %v970, 0.0
    %v1015 = vmax.f32 %v973, 0.0
    %v1016 = vmax.f32 %v978, 0.0
    %v1017 = vmax.f32 %v981, 0.0
    %v1018 = vmax.f32 %v986, 0.0
    %v1019 = vmax.f32 %v989, 0.0
    %v1020 = vmax.f32 %v994, 0.0
    %v1021 = vmax.f32 %v997, 0.0
    %v1022 = vmax.f32 %v1002, 0.0
    %v1023 = vmax.f32 %v1005, 0.0
    %v1024 = vpack.c.bf16 %v1009, %v1008
    %v1025 = vpack.c.bf16 %v1011, %v1010
    %v1026 = vpack.c.bf16 %v1013, %v1012
    %v1027 = vpack.c.bf16 %v1015, %v1014
    %v1028 = vpack.c.bf16 %v1017, %v1016
    %v1029 = vpack.c.bf16 %v1019, %v1018
    %v1030 = vpack.c.bf16 %v1021, %v1020
    %v1031 = vpack.c.bf16 %v1023, %v1022
    %v1032 = vld [vmem:[%s3] sm:$0xf]
    %v1033 = vld [vmem:[%s3 + $0x4] sm:$0xf]
    %v1034 = vld [vmem:[%s3 + $0x8] sm:$0xf]
    %v1035 = vld [vmem:[%s3 + $0xc] sm:$0xf]
    %v1036 = vld [vmem:[%s3 + $0x10] sm:$0xf]
    %v1037 = vld [vmem:[%s3 + $0x14] sm:$0xf]
    %v1038 = vld [vmem:[%s3 + $0x18] sm:$0xf]
    %v1039 = vld [vmem:[%s3 + $0x1c] sm:$0xf]
    %v1040 = vld [vmem:[%s3 + $0x20] sm:$0xf]
    %v1041 = vld [vmem:[%s3 + $0x24] sm:$0xf]
    %v1042 = vld [vmem:[%s3 + $0x28] sm:$0xf]
    %v1043 = vld [vmem:[%s3 + $0x2c] sm:$0xf]
    %v1044 = vld [vmem:[%s3 + $0x30] sm:$0xf]
    %v1045 = vld [vmem:[%s3 + $0x34] sm:$0xf]
    %v1046 = vld [vmem:[%s3 + $0x38] sm:$0xf]
    %v1047 = vld [vmem:[%s3 + $0x3c] sm:$0xf]
    %v1048 = vld [vmem:[%s4] sm:$0x1]
    %v1050 = vlaneseq
    %v1051 = vshrl.u32 %v1050, 7
    %v1052 = vsub.s32 0, %v1051
    %v1053 = vrot.slane %v1048, %v1052
    %v1071 = vunpack.c.l.b16 %v1032
    %v1072 = vunpack.c.l.b16 %v1033
    %v1073 = vunpack.c.l.b16 %v1034
    %v1074 = vunpack.c.l.b16 %v1035
    %v1075 = vunpack.c.l.b16 %v1036
    %v1076 = vunpack.c.l.b16 %v1037
    %v1077 = vunpack.c.l.b16 %v1038
    %v1078 = vunpack.c.l.b16 %v1039
    %v1079 = vunpack.c.l.b16 %v1040
    %v1080 = vunpack.c.l.b16 %v1041
    %v1081 = vunpack.c.l.b16 %v1042
    %v1082 = vunpack.c.l.b16 %v1043
    %v1083 = vunpack.c.l.b16 %v1044
    %v1084 = vunpack.c.l.b16 %v1045
    %v1085 = vunpack.c.l.b16 %v1046
    %v1086 = vunpack.c.l.b16 %v1047
    %v1087 = vpack.c.b16 %v1072, %v1071
    %v1088 = vpack.c.b16 %v1074, %v1073
    %v1089 = vpack.c.b16 %v1076, %v1075
    %v1090 = vpack.c.b16 %v1078, %v1077
    %v1091 = vpack.c.b16 %v1080, %v1079
    %v1092 = vpack.c.b16 %v1082, %v1081
    %v1093 = vpack.c.b16 %v1084, %v1083
    %v1094 = vpack.c.b16 %v1086, %v1085
    %1103 = vmatprep.subr.bf16.mxu0 0
    %1104 = vmatpush1.bf16.msra.mxu0 %v1087
    %1105 = vmatprep.subr.bf16.mxu0 0
    %1106 = vmatpush1.bf16.msra.mxu0 %v1088
    %1107 = vmatprep.subr.bf16.mxu0 0
    %1108 = vmatpush1.bf16.msra.mxu0 %v1089
    %1109 = vmatprep.subr.bf16.mxu0 0
    %1110 = vmatpush1.bf16.msra.mxu0 %v1090
    %1111 = vmatprep.subr.bf16.mxu0 0
    %1112 = vmatpush1.bf16.msra.mxu0 %v1091
    %1113 = vmatprep.subr.bf16.mxu0 0
    %1114 = vmatpush1.bf16.msra.mxu0 %v1092
    %1115 = vmatprep.subr.bf16.mxu0 0
    %1116 = vmatpush1.bf16.msra.mxu0 %v1093
    %1117 = vmatprep.subr.bf16.mxu0 0
    %1118 = vmatpush1.bf16.msra.mxu0 %v1094
    %1119 = vmatprep.subr.bf16.mxu0 0
    %1120 = vmatpush1.bf16.msra.mxu0 0
    %1121 = vmatprep.subr.bf16.mxu0 0
    %1122 = vmatpush1.bf16.msra.mxu0 0
    %1123 = vmatprep.subr.bf16.mxu0 0
    %1124 = vmatpush1.bf16.msra.mxu0 0
    %1125 = vmatprep.subr.bf16.mxu0 0
    %1126 = vmatpush1.bf16.msra.mxu0 0
    %1127 = vmatprep.subr.bf16.mxu0 0
    %1128 = vmatpush1.bf16.msra.mxu0 0
    %1129 = vmatprep.subr.bf16.mxu0 0
    %1130 = vmatpush1.bf16.msra.mxu0 0
    %1131 = vmatprep.subr.bf16.mxu0 0
    %1132 = vmatpush1.bf16.msra.mxu0 0
    %1133 = vmatprep.subr.bf16.mxu0 0
    %1134 = vmatpush1.bf16.msra.mxu0 0
    %1135 = vmatprep.mubr.bf16.mxu0 0
    %1136 = vmatmul.mubr.bf16.gmra.mrb[0].mxu0 %v1024
    %v1137 = vpop.f32.mrb[0].mxu0
    %v1138 = vadd.f32 %v1053, %v1137
    %v1139 = vpop.f32.mrb[0].mxu0
    %v1140 = vpop.f32.mrb[0].mxu0
    %v1141 = vadd.f32 %v1053, %v1140
    %v1142 = vpop.f32.mrb[0].mxu0
    %1143 = vmatprep.mubr.bf16.mxu0 0
    %1144 = vmatmul.mubr.bf16.gmra.mrb[0].mxu0 %v1025
    %v1145 = vpop.f32.mrb[0].mxu0
    %v1146 = vadd.f32 %v1053, %v1145
    %v1147 = vpop.f32.mrb[0].mxu0
    %v1148 = vpop.f32.mrb[0].mxu0
    %v1149 = vadd.f32 %v1053, %v1148
    %v1150 = vpop.f32.mrb[0].mxu0
    %1151 = vmatprep.mubr.bf16.mxu0 0
    %1152 = vmatmul.mubr.bf16.gmra.mrb[0].mxu0 %v1026
    %v1153 = vpop.f32.mrb[0].mxu0
    %v1154 = vadd.f32 %v1053, %v1153
    %v1155 = vpop.f32.mrb[0].mxu0
    %v1156 = vpop.f32.mrb[0].mxu0
    %v1157 = vadd.f32 %v1053, %v1156
    %v1158 = vpop.f32.mrb[0].mxu0
    %1159 = vmatprep.mubr.bf16.mxu0 0
    %1160 = vmatmul.mubr.bf16.gmra.mrb[0].mxu0 %v1027
    %v1161 = vpop.f32.mrb[0].mxu0
    %v1162 = vadd.f32 %v1053, %v1161
    %v1163 = vpop.f32.mrb[0].mxu0
    %v1164 = vpop.f32.mrb[0].mxu0
    %v1165 = vadd.f32 %v1053, %v1164
    %v1166 = vpop.f32.mrb[0].mxu0
    %1167 = vmatprep.mubr.bf16.mxu0 0
    %1168 = vmatmul.mubr.bf16.gmra.mrb[0].mxu0 %v1028
    %v1169 = vpop.f32.mrb[0].mxu0
    %v1170 = vadd.f32 %v1053, %v1169
    %v1171 = vpop.f32.mrb[0].mxu0
    %v1172 = vpop.f32.mrb[0].mxu0
    %v1173 = vadd.f32 %v1053, %v1172
    %v1174 = vpop.f32.mrb[0].mxu0
    %1175 = vmatprep.mubr.bf16.mxu0 0
    %1176 = vmatmul.mubr.bf16.gmra.mrb[0].mxu0 %v1029
    %v1177 = vpop.f32.mrb[0].mxu0
    %v1178 = vadd.f32 %v1053, %v1177
    %v1179 = vpop.f32.mrb[0].mxu0
    %v1180 = vpop.f32.mrb[0].mxu0
    %v1181 = vadd.f32 %v1053, %v1180
    %v1182 = vpop.f32.mrb[0].mxu0
    %1183 = vmatprep.mubr.bf16.mxu0 0
    %1184 = vmatmul.mubr.bf16.gmra.mrb[0].mxu0 %v1030
    %v1185 = vpop.f32.mrb[0].mxu0
    %v1186 = vadd.f32 %v1053, %v1185
    %v1187 = vpop.f32.mrb[0].mxu0
    %v1188 = vpop.f32.mrb[0].mxu0
    %v1189 = vadd.f32 %v1053, %v1188
    %v1190 = vpop.f32.mrb[0].mxu0
    %1191 = vmatprep.mubr.bf16.mxu0 0
    %1192 = vmatmul.mubr.bf16.gmra.mrb[0].mxu0 %v1031
    %v1193 = vpop.f32.mrb[0].mxu0
    %v1194 = vadd.f32 %v1053, %v1193
    %v1195 = vpop.f32.mrb[0].mxu0
    %v1196 = vpop.f32.mrb[0].mxu0
    %v1197 = vadd.f32 %v1053, %v1196
    %v1198 = vpop.f32.mrb[0].mxu0
    %1199 = vdwg.mxu0
    %v1200 = vmax.f32 %v1138, 0.0
    %v1201 = vmax.f32 %v1141, 0.0
    %v1202 = vmax.f32 %v1146, 0.0
    %v1203 = vmax.f32 %v1149, 0.0
    %v1204 = vmax.f32 %v1154, 0.0
    %v1205 = vmax.f32 %v1157, 0.0
    %v1206 = vmax.f32 %v1162, 0.0
    %v1207 = vmax.f32 %v1165, 0.0
    %v1208 = vmax.f32 %v1170, 0.0
    %v1209 = vmax.f32 %v1173, 0.0
    %v1210 = vmax.f32 %v1178, 0.0
    %v1211 = vmax.f32 %v1181, 0.0
    %v1212 = vmax.f32 %v1186, 0.0
    %v1213 = vmax.f32 %v1189, 0.0
    %v1214 = vmax.f32 %v1194, 0.0
    %v1215 = vmax.f32 %v1197, 0.0
    %v1216 = vpack.c.bf16 %v1201, %v1200
    %v1217 = vpack.c.bf16 %v1203, %v1202
    %v1218 = vpack.c.bf16 %v1205, %v1204
    %v1219 = vpack.c.bf16 %v1207, %v1206
    %v1220 = vpack.c.bf16 %v1209, %v1208
    %v1221 = vpack.c.bf16 %v1211, %v1210
    %v1222 = vpack.c.bf16 %v1213, %v1212
    %v1223 = vpack.c.bf16 %v1215, %v1214
    %v1224 = vld [vmem:[%s5] sm:$0xf]
    %v1225 = vld [vmem:[%s5 + $0x4] sm:$0xf]
    %v1226 = vld [vmem:[%s5 + $0x8] sm:$0xf]
    %v1227 = vld [vmem:[%s5 + $0xc] sm:$0xf]
    %v1228 = vld [vmem:[%s5 + $0x10] sm:$0xf]
    %v1229 = vld [vmem:[%s5 + $0x14] sm:$0xf]
    %v1230 = vld [vmem:[%s5 + $0x18] sm:$0xf]
    %v1231 = vld [vmem:[%s5 + $0x1c] sm:$0xf]
    %v1232 = vld [vmem:[%s5 + $0x20] sm:$0xf]
    %v1233 = vld [vmem:[%s5 + $0x24] sm:$0xf]
    %v1234 = vld [vmem:[%s5 + $0x28] sm:$0xf]
    %v1235 = vld [vmem:[%s5 + $0x2c] sm:$0xf]
    %v1236 = vld [vmem:[%s5 + $0x30] sm:$0xf]
    %v1237 = vld [vmem:[%s5 + $0x34] sm:$0xf]
    %v1238 = vld [vmem:[%s5 + $0x38] sm:$0xf]
    %v1239 = vld [vmem:[%s5 + $0x3c] sm:$0xf]
    %v1240 = vld [vmem:[%s6] sm:$0x1]
    %v1242 = vlaneseq
    %v1243 = vshrl.u32 %v1242, 7
    %v1244 = vsub.s32 0, %v1243
    %v1245 = vrot.slane %v1240, %v1244
    %v1263 = vunpack.c.l.b16 %v1224
    %v1264 = vunpack.c.l.b16 %v1225
    %v1265 = vunpack.c.l.b16 %v1226
    %v1266 = vunpack.c.l.b16 %v1227
    %v1267 = vunpack.c.l.b16 %v1228
    %v1268 = vunpack.c.l.b16 %v1229
    %v1269 = vunpack.c.l.b16 %v1230
    %v1270 = vunpack.c.l.b16 %v1231
    %v1271 = vunpack.c.l.b16 %v1232
    %v1272 = vunpack.c.l.b16 %v1233
    %v1273 = vunpack.c.l.b16 %v1234
    %v1274 = vunpack.c.l.b16 %v1235
    %v1275 = vunpack.c.l.b16 %v1236
    %v1276 = vunpack.c.l.b16 %v1237
    %v1277 = vunpack.c.l.b16 %v1238
    %v1278 = vunpack.c.l.b16 %v1239
    %v1279 = vpack.c.b16 %v1264, %v1263
    %v1280 = vpack.c.b16 %v1266, %v1265
    %v1281 = vpack.c.b16 %v1268, %v1267
    %v1282 = vpack.c.b16 %v1270, %v1269
    %v1283 = vpack.c.b16 %v1272, %v1271
    %v1284 = vpack.c.b16 %v1274, %v1273
    %v1285 = vpack.c.b16 %v1276, %v1275
    %v1286 = vpack.c.b16 %v1278, %v1277
    %1295 = vmatprep.subr.bf16.mxu0 0
    %1296 = vmatpush1.bf16.msra.mxu0 %v1279
    %1297 = vmatprep.subr.bf16.mxu0 0
    %1298 = vmatpush1.bf16.msra.mxu0 %v1280
    %1299 = vmatprep.subr.bf16.mxu0 0
    %1300 = vmatpush1.bf16.msra.mxu0 %v1281
    %1301 = vmatprep.subr.bf16.mxu0 0
    %1302 = vmatpush1.bf16.msra.mxu0 %v1282
    %1303 = vmatprep.subr.bf16.mxu0 0
    %1304 = vmatpush1.bf16.msra.mxu0 %v1283
    %1305 = vmatprep.subr.bf16.mxu0 0
    %1306 = vmatpush1.bf16.msra.mxu0 %v1284
    %1307 = vmatprep.subr.bf16.mxu0 0
    %1308 = vmatpush1.bf16.msra.mxu0 %v1285
    %1309 = vmatprep.subr.bf16.mxu0 0
    %1310 = vmatpush1.bf16.msra.mxu0 %v1286
    %1311 = vmatprep.subr.bf16.mxu0 0
    %1312 = vmatpush1.bf16.msra.mxu0 0
    %1313 = vmatprep.subr.bf16.mxu0 0
    %1314 = vmatpush1.bf16.msra.mxu0 0
    %1315 = vmatprep.subr.bf16.mxu0 0
    %1316 = vmatpush1.bf16.msra.mxu0 0
    %1317 = vmatprep.subr.bf16.mxu0 0
    %1318 = vmatpush1.bf16.msra.mxu0 0
    %1319 = vmatprep.subr.bf16.mxu0 0
    %1320 = vmatpush1.bf16.msra.mxu0 0
    %1321 = vmatprep.subr.bf16.mxu0 0
    %1322 = vmatpush1.bf16.msra.mxu0 0
    %1323 = vmatprep.subr.bf16.mxu0 0
    %1324 = vmatpush1.bf16.msra.mxu0 0
    %1325 = vmatprep.subr.bf16.mxu0 0
    %1326 = vmatpush1.bf16.msra.mxu0 0
    %1327 = vmatprep.mubr.bf16.mxu0 0
    %1328 = vmatmul.mubr.bf16.gmra.mrb[0].mxu0 %v1216
    %v1329 = vpop.f32.mrb[0].mxu0
    %v1330 = vadd.f32 %v1245, %v1329
    %v1331 = vpop.f32.mrb[0].mxu0
    %v1332 = vpop.f32.mrb[0].mxu0
    %v1333 = vadd.f32 %v1245, %v1332
    %v1334 = vpop.f32.mrb[0].mxu0
    %1335 = vmatprep.mubr.bf16.mxu0 0
    %1336 = vmatmul.mubr.bf16.gmra.mrb[0].mxu0 %v1217
    %v1337 = vpop.f32.mrb[0].mxu0
    %v1338 = vadd.f32 %v1245, %v1337
    %v1339 = vpop.f32.mrb[0].mxu0
    %v1340 = vpop.f32.mrb[0].mxu0
    %v1341 = vadd.f32 %v1245, %v1340
    %v1342 = vpop.f32.mrb[0].mxu0
    %1343 = vmatprep.mubr.bf16.mxu0 0
    %1344 = vmatmul.mubr.bf16.gmra.mrb[0].mxu0 %v1218
    %v1345 = vpop.f32.mrb[0].mxu0
    %v1346 = vadd.f32 %v1245, %v1345
    %v1347 = vpop.f32.mrb[0].mxu0
    %v1348 = vpop.f32.mrb[0].mxu0
    %v1349 = vadd.f32 %v1245, %v1348
    %v1350 = vpop.f32.mrb[0].mxu0
    %1351 = vmatprep.mubr.bf16.mxu0 0
    %1352 = vmatmul.mubr.bf16.gmra.mrb[0].mxu0 %v1219
    %v1353 = vpop.f32.mrb[0].mxu0
    %v1354 = vadd.f32 %v1245, %v1353
    %v1355 = vpop.f32.mrb[0].mxu0
    %v1356 = vpop.f32.mrb[0].mxu0
    %v1357 = vadd.f32 %v1245, %v1356
    %v1358 = vpop.f32.mrb[0].mxu0
    %1359 = vmatprep.mubr.bf16.mxu0 0
    %1360 = vmatmul.mubr.bf16.gmra.mrb[0].mxu0 %v1220
    %v1361 = vpop.f32.mrb[0].mxu0
    %v1362 = vadd.f32 %v1245, %v1361
    %v1363 = vpop.f32.mrb[0].mxu0
    %v1364 = vpop.f32.mrb[0].mxu0
    %v1365 = vadd.f32 %v1245, %v1364
    %v1366 = vpop.f32.mrb[0].mxu0
    %1367 = vmatprep.mubr.bf16.mxu0 0
    %1368 = vmatmul.mubr.bf16.gmra.mrb[0].mxu0 %v1221
    %v1369 = vpop.f32.mrb[0].mxu0
    %v1370 = vadd.f32 %v1245, %v1369
    %v1371 = vpop.f32.mrb[0].mxu0
    %v1372 = vpop.f32.mrb[0].mxu0
    %v1373 = vadd.f32 %v1245, %v1372
    %v1374 = vpop.f32.mrb[0].mxu0
    %1375 = vmatprep.mubr.bf16.mxu0 0
    %1376 = vmatmul.mubr.bf16.gmra.mrb[0].mxu0 %v1222
    %v1377 = vpop.f32.mrb[0].mxu0
    %v1378 = vadd.f32 %v1245, %v1377
    %v1379 = vpop.f32.mrb[0].mxu0
    %v1380 = vpop.f32.mrb[0].mxu0
    %v1381 = vadd.f32 %v1245, %v1380
    %v1382 = vpop.f32.mrb[0].mxu0
    %1383 = vmatprep.mubr.bf16.mxu0 0
    %1384 = vmatmul.mubr.bf16.gmra.mrb[0].mxu0 %v1223
    %v1385 = vpop.f32.mrb[0].mxu0
    %v1386 = vadd.f32 %v1245, %v1385
    %v1387 = vpop.f32.mrb[0].mxu0
    %v1388 = vpop.f32.mrb[0].mxu0
    %v1389 = vadd.f32 %v1245, %v1388
    %v1390 = vpop.f32.mrb[0].mxu0
    %1391 = vdwg.mxu0
    %v1392 = vpack.c.bf16 %v1333, %v1330
    %v1393 = vpack.c.bf16 %v1341, %v1338
    %v1394 = vpack.c.bf16 %v1349, %v1346
    %v1395 = vpack.c.bf16 %v1357, %v1354
    %v1396 = vpack.c.bf16 %v1365, %v1362
    %v1397 = vpack.c.bf16 %v1373, %v1370
    %v1398 = vpack.c.bf16 %v1381, %v1378
    %v1399 = vpack.c.bf16 %v1389, %v1386
    %v1408 = vunpack.c.l.b16 %v1392
    %v1409 = vunpack.c.h.b16 %v1392
    %v1410 = vunpack.c.l.b16 %v1393
    %v1411 = vunpack.c.h.b16 %v1393
    %v1412 = vunpack.c.l.b16 %v1394
    %v1413 = vunpack.c.h.b16 %v1394
    %v1414 = vunpack.c.l.b16 %v1395
    %v1415 = vunpack.c.h.b16 %v1395
    %v1416 = vunpack.c.l.b16 %v1396
    %v1417 = vunpack.c.h.b16 %v1396
    %v1418 = vunpack.c.l.b16 %v1397
    %v1419 = vunpack.c.h.b16 %v1397
    %v1420 = vunpack.c.l.b16 %v1398
    %v1421 = vunpack.c.h.b16 %v1398
    %v1422 = vunpack.c.l.b16 %v1399
    %v1423 = vunpack.c.h.b16 %v1399
    %v1424 = vpack.c.b16 %v1408, %v1408
    %v1425 = vpack.c.b16 %v1409, %v1409
    %v1426 = vpack.c.b16 %v1410, %v1410
    %v1427 = vpack.c.b16 %v1411, %v1411
    %v1428 = vpack.c.b16 %v1412, %v1412
    %v1429 = vpack.c.b16 %v1413, %v1413
    %v1430 = vpack.c.b16 %v1414, %v1414
    %v1431 = vpack.c.b16 %v1415, %v1415
    %v1432 = vpack.c.b16 %v1416, %v1416
    %v1433 = vpack.c.b16 %v1417, %v1417
    %v1434 = vpack.c.b16 %v1418, %v1418
    %v1435 = vpack.c.b16 %v1419, %v1419
    %v1436 = vpack.c.b16 %v1420, %v1420
    %v1437 = vpack.c.b16 %v1421, %v1421
    %v1438 = vpack.c.b16 %v1422, %v1422
    %v1439 = vpack.c.b16 %v1423, %v1423
    %1456 = vst [vmem:[#allocation2] sm:$0xf] %v1424
    %1457 = vst [vmem:[#allocation2 + $0x4] sm:$0xf] %v1425
    %1458 = vst [vmem:[#allocation2 + $0x8] sm:$0xf] %v1426
    %1459 = vst [vmem:[#allocation2 + $0xc] sm:$0xf] %v1427
    %1460 = vst [vmem:[#allocation2 + $0x10] sm:$0xf] %v1428
    %1461 = vst [vmem:[#allocation2 + $0x14] sm:$0xf] %v1429
    %1462 = vst [vmem:[#allocation2 + $0x18] sm:$0xf] %v1430
    %1463 = vst [vmem:[#allocation2 + $0x1c] sm:$0xf] %v1431
    %1464 = vst [vmem:[#allocation2 + $0x20] sm:$0xf] %v1432
    %1465 = vst [vmem:[#allocation2 + $0x24] sm:$0xf] %v1433
    %1466 = vst [vmem:[#allocation2 + $0x28] sm:$0xf] %v1434
    %1467 = vst [vmem:[#allocation2 + $0x2c] sm:$0xf] %v1435
    %1468 = vst [vmem:[#allocation2 + $0x30] sm:$0xf] %v1436
    %1469 = vst [vmem:[#allocation2 + $0x34] sm:$0xf] %v1437
    %1470 = vst [vmem:[#allocation2 + $0x38] sm:$0xf] %v1438
    %1471 = vst [vmem:[#allocation2 + $0x3c] sm:$0xf] %v1439
    // Predicated region
    $region30: #{tpu_custom_call.1} parent=1 // pred_check
      _
    $region31: #{tpu_custom_call.1} parent=1 // pred_check_branch
      %1473 = sbr.rel (0) target = $region33
    $region32: #{tpu_custom_call.1} parent=1 // pred_region
      %s1475 = ssub.s32 1024, 1024
      %1476 = vsyncadd [#allocation3], %s1475
      %s1477 = sshll.u32 [#allocation2], 4
      %s1478 = int_to_ptr.vmem [resolvable:$true] %s1477
      %1483 = dma.vmem_to_hbm [thread:$0]  %s1478, 1024, %s7, [#allocation3], 64, 64, 4
    $region33: #{tpu_custom_call.1} parent=1 // pred_fallthru
      _
    // Predicated region
    $region34: #{tpu_custom_call.1} parent=1 // pred_check
      _
    $region35: #{tpu_custom_call.1} parent=1 // pred_check_branch
      %1485 = sbr.rel (0) target = $region37
    $region36: #{tpu_custom_call.1} parent=1 // pred_region
      %1486 = dma.done [#allocation3], 1024
    $region37: #{tpu_custom_call.1} parent=1 // pred_fallthru
      _
    %1487 = vsyncpa [#allocation3], 1

</llo_original>
